<compile_context>
chip_gen: v5e
topology: v5e:2x2
jax: 0.10.0
libtpu: 0.0.40
codegen_flags: <defaults>
</compile_context>

<pallas_src>
import jax
import jax.numpy as jnp
import numpy as np
from jax.experimental import pallas as pl
from jax.experimental.pallas import tpu as pltpu

_MIN_GRID_STEPS = 8  # keep the pipeline busy / both v7x TensorCores fed


def _make_pool_kernel(k, w, wo, ct, n_full, rem, mxu_dtype):
    """Kernel for one (TB, Lin) block of packed super-rows."""
    scale = 0.25

    def kernel(x_ref, s_ref, o_ref, v_ref):
        # 1) Vertical pre-add (VPU, f32): pack the K pair-sums into v_ref.
        for m in range(k):
            base = 2 * m * w
            top = x_ref[:, base:base + w].astype(jnp.float32)
            bot = x_ref[:, base + w:base + 2 * w].astype(jnp.float32)
            v_ref[:, m * w:(m + 1) * w] = (top + bot).astype(mxu_dtype)

        # 2) Horizontal pair-sum + lane compaction: out[o] = v[2o] + v[2o+1],
        #    done in <=128-lane output chunks so every MXU depth tile is useful.
        s = s_ref[...]
        for j in range(n_full):
            acc = jnp.dot(v_ref[:, 2 * ct * j:2 * ct * (j + 1)], s,
                          preferred_element_type=jnp.float32)
            o_ref[:, ct * j:ct * (j + 1)] = (acc * scale).astype(o_ref.dtype)
        if rem:
            acc = jnp.dot(v_ref[:, 2 * ct * n_full:2 * ct * n_full + 2 * rem],
                          s[:2 * rem, :rem],
                          preferred_element_type=jnp.float32)
            o_ref[:, ct * n_full:ct * n_full + rem] = (acc * scale).astype(o_ref.dtype)

    return kernel


def _vmem_limit_bytes():
    """Generation-aware scoped-VMEM limit (above the 16/32 MiB defaults but
    well inside physical capacity: 64 MiB/core on v7x, 128 MiB on v5e/v6e)."""
    try:
        cap = int(pltpu.get_tpu_info().vmem_capacity_bytes)
    except Exception:
        cap = 64 * 1024 * 1024
    return max(32 * 1024 * 1024, min(cap // 2, 64 * 1024 * 1024))


def _pick_k(n_pairs, wo):
    """Row-pairs packed per super-row so the pooled output row is lane-dense."""
    k_want = -(-128 // wo)  # ceil(128 / Wo)
    hi = min(n_pairs, max(64, k_want))
    # Prefer the smallest K >= k_want whose packed output is a whole number of
    # 128-lane tiles and that divides the pair count (keeps the reshape free).
    for cand in range(k_want, hi + 1):
        if n_pairs % cand == 0 and (cand * wo) % 128 == 0:
            return cand
    for cand in range(k_want, hi + 1):
        if n_pairs % cand == 0:
            return cand
    # Fallback (may lose lane density); see TODO(synk) above.
    for cand in range(min(k_want, n_pairs), 0, -1):
        if n_pairs % cand == 0:
            return cand
    return 1


def _pick_block_rows(n_rows, bytes_per_row, budget_bytes, sub):
    """Super-rows per grid step: VMEM-budgeted, sublane-aligned, and capped so
    the grid keeps >= _MIN_GRID_STEPS steps (never a useless 1-step pipeline
    unless the whole problem fits in one tiny block)."""
    tb = max(sub, budget_bytes // max(bytes_per_row, 1))
    tb = min(tb, max(sub, pl.cdiv(n_rows, _MIN_GRID_STEPS)))
    tb -= tb % sub
    tb = max(tb, sub)
    if tb >= n_rows:
        return n_rows
    return tb


def downscale(x):
    """avg_pool2d(x, kernel_size=2, stride=2) for an NCHW input tensor."""
    B, C, H, W = x.shape
    Ho, Wo = H // 2, W // 2
    assert Ho > 0 and Wo > 0, "spatial dims must be >= 2"
    # PyTorch floor behaviour: a trailing odd row/col is ignored.
    if H % 2 or W % 2:
        x = x[:, :, :2 * Ho, :2 * Wo]
        H, W = 2 * Ho, 2 * Wo

    dtype = x.dtype
    itemsize = jnp.dtype(dtype).itemsize
    # bf16 stays on the single-pass bf16 MXU (0/1 weights + f32 acc); other
    # dtypes (incl. f32) are pre-added and contracted in f32.
    mxu_dtype = jnp.bfloat16 if dtype == jnp.bfloat16 else jnp.float32
    mxu_itemsize = jnp.dtype(mxu_dtype).itemsize

    n_pairs = B * C * Ho                    # independent vertical row pairs
    k = _pick_k(n_pairs, Wo)
    lin, lout = 2 * k * W, k * Wo           # packed input / output row lengths
    n_rows = n_pairs // k

    ct = min(128, lout)                     # output-lane chunk per matmul
    n_full, rem = lout // ct, lout % ct

    # Constant pairwise-sum / compaction matrix: S[r, r // 2] = 1.
    s_np = np.zeros((2 * ct, ct), dtype=np.float32)
    idx = np.arange(2 * ct)
    s_np[idx, idx // 2] = 1.0
    s = jnp.asarray(s_np, dtype=mxu_dtype)

    # --- VMEM-budgeted block of super-rows per grid step ---------------------
    sub = 8 if itemsize >= 4 else (16 if itemsize == 2 else 32)
    vmem_limit = _vmem_limit_bytes()
    s_bytes = 2 * (2 * ct) * ct * mxu_itemsize            # double-buffered S
    bytes_per_row = (2 * (lin + lout) * itemsize           # dbl-buffered in/out
                     + (lin // 2) * mxu_itemsize)          # v scratch
    tile_budget = max(vmem_limit // 2 - s_bytes, 2 * 1024 * 1024)
    tb = _pick_block_rows(n_rows, bytes_per_row, tile_budget, sub)
    grid = (pl.cdiv(n_rows, tb),)

    xr = x.reshape(n_rows, lin)             # contiguous reshape: free

    cost = pl.CostEstimate(
        flops=4 * n_rows * lout,            # 3 adds + 1 scale per output element
        transcendentals=0,
        bytes_accessed=n_rows * (lin + lout) * itemsize + 2 * ct * ct * mxu_itemsize,
    )

    kernel = _make_pool_kernel(k, W, Wo, ct, n_full, rem, mxu_dtype)
    out = pl.pallas_call(
        kernel,
        out_shape=jax.ShapeDtypeStruct((n_rows, lout), dtype),
        grid=grid,
        in_specs=[
            pl.BlockSpec((tb, lin), lambda i: (i, 0)),
            pl.BlockSpec((2 * ct, ct), lambda i: (0, 0)),   # grid-invariant S
        ],
        out_specs=pl.BlockSpec((tb, lout), lambda i: (i, 0)),
        scratch_shapes=[pltpu.VMEM((tb, lin // 2), mxu_dtype)],
        compiler_params=pltpu.CompilerParams(
            dimension_semantics=("parallel",),
            vmem_limit_bytes=vmem_limit,
        ),
        cost_estimate=cost,
    )(xr, s)
    return out.reshape(B, C, Ho, Wo)


if __name__ == "__main__":
    key = jax.random.PRNGKey(0)
    B, C, H, W = 2, 4, 16, 16
    x = jax.random.normal(key, (B, C, H, W), dtype=jnp.float32)

    y = jax.block_until_ready(downscale(x))

    # Pure-JAX reference: mean over each non-overlapping 2x2 window.
    ref = x.reshape(B, C, H // 2, 2, W // 2, 2).mean(axis=(3, 5))

    assert y.shape == (B, C, H // 2, W // 2), y.shape
    assert y.dtype == x.dtype, y.dtype
    np.testing.assert_allclose(np.asarray(y), np.asarray(ref), rtol=1e-6, atol=1e-6)

    print("KERNEL_OK")
</pallas_src>

<mosaic_0001>
module attributes {stable_mosaic.version = 11 : i64} {
  func.func @kernel(%arg0: i32, %arg1: memref<4x512xf32, #tpu.memory_space<vmem>>, %arg2: memref<256x128xf32, #tpu.memory_space<vmem>>, %arg3: memref<4x128xf32, #tpu.memory_space<vmem>>, %arg4: memref<4x256xf32, #tpu.memory_space<vmem>>) attributes {dimension_semantics = [#tpu.dimension_semantics<parallel>], iteration_bounds = array<i64: 1>, scalar_prefetch = 0 : i64, scratch_operands = 1 : i64, tpu.core_type = #tpu.core_type<tc>, window_params = [{transform_indices = @transform_0, window_bounds = array<i64: 4, 512>}, {pipeline_mode = #tpu.pipeline_mode<synchronous>, transform_indices = @transform_1, window_bounds = array<i64: 256, 128>}, {transform_indices = @transform_2, window_bounds = array<i64: 4, 128>}]} {
    %c0 = arith.constant 0 : index
    %c0_0 = arith.constant 0 : index
    %0 = vector.load %arg1[%c0, %c0_0] : memref<4x512xf32, #tpu.memory_space<vmem>>, vector<4x16xf32>
    %c0_1 = arith.constant 0 : index
    %c16 = arith.constant 16 : index
    %1 = vector.load %arg1[%c0_1, %c16] : memref<4x512xf32, #tpu.memory_space<vmem>>, vector<4x16xf32>
    %2 = arith.addf %0, %1 : vector<4x16xf32>
    %c0_2 = arith.constant 0 : index
    %c0_3 = arith.constant 0 : index
    %3 = vector.load %arg4[%c0_2, %c0_3] : memref<4x256xf32, #tpu.memory_space<vmem>>, vector<4x16xf32>
    tpu.vector_store %arg4[%c0_2, %c0_3], %2 {strides = array<i32>} : memref<4x256xf32, #tpu.memory_space<vmem>>, vector<4x16xf32>,
    %c0_4 = arith.constant 0 : index
    %c32 = arith.constant 32 : index
    %4 = vector.load %arg1[%c0_4, %c32] : memref<4x512xf32, #tpu.memory_space<vmem>>, vector<4x16xf32>
    %c0_5 = arith.constant 0 : index
    %c48 = arith.constant 48 : index
    %5 = vector.load %arg1[%c0_5, %c48] : memref<4x512xf32, #tpu.memory_space<vmem>>, vector<4x16xf32>
    %6 = arith.addf %4, %5 : vector<4x16xf32>
    %c0_6 = arith.constant 0 : index
    %c16_7 = arith.constant 16 : index
    %7 = vector.load %arg4[%c0_6, %c16_7] : memref<4x256xf32, #tpu.memory_space<vmem>>, vector<4x16xf32>
    tpu.vector_store %arg4[%c0_6, %c16_7], %6 {strides = array<i32>} : memref<4x256xf32, #tpu.memory_space<vmem>>, vector<4x16xf32>,
    %c0_8 = arith.constant 0 : index
    %c64 = arith.constant 64 : index
    %8 = vector.load %arg1[%c0_8, %c64] : memref<4x512xf32, #tpu.memory_space<vmem>>, vector<4x16xf32>
    %c0_9 = arith.constant 0 : index
    %c80 = arith.constant 80 : index
    %9 = vector.load %arg1[%c0_9, %c80] : memref<4x512xf32, #tpu.memory_space<vmem>>, vector<4x16xf32>
    %10 = arith.addf %8, %9 : vector<4x16xf32>
    %c0_10 = arith.constant 0 : index
    %c32_11 = arith.constant 32 : index
    %11 = vector.load %arg4[%c0_10, %c32_11] : memref<4x256xf32, #tpu.memory_space<vmem>>, vector<4x16xf32>
    tpu.vector_store %arg4[%c0_10, %c32_11], %10 {strides = array<i32>} : memref<4x256xf32, #tpu.memory_space<vmem>>, vector<4x16xf32>,
    %c0_12 = arith.constant 0 : index
    %c96 = arith.constant 96 : index
    %12 = vector.load %arg1[%c0_12, %c96] : memref<4x512xf32, #tpu.memory_space<vmem>>, vector<4x16xf32>
    %c0_13 = arith.constant 0 : index
    %c112 = arith.constant 112 : index
    %13 = vector.load %arg1[%c0_13, %c112] : memref<4x512xf32, #tpu.memory_space<vmem>>, vector<4x16xf32>
    %14 = arith.addf %12, %13 : vector<4x16xf32>
    %c0_14 = arith.constant 0 : index
    %c48_15 = arith.constant 48 : index
    %15 = vector.load %arg4[%c0_14, %c48_15] : memref<4x256xf32, #tpu.memory_space<vmem>>, vector<4x16xf32>
    tpu.vector_store %arg4[%c0_14, %c48_15], %14 {strides = array<i32>} : memref<4x256xf32, #tpu.memory_space<vmem>>, vector<4x16xf32>,
    %c0_16 = arith.constant 0 : index
    %c128 = arith.constant 128 : index
    %16 = vector.load %arg1[%c0_16, %c128] : memref<4x512xf32, #tpu.memory_space<vmem>>, vector<4x16xf32>
    %c0_17 = arith.constant 0 : index
    %c144 = arith.constant 144 : index
    %17 = vector.load %arg1[%c0_17, %c144] : memref<4x512xf32, #tpu.memory_space<vmem>>, vector<4x16xf32>
    %18 = arith.addf %16, %17 : vector<4x16xf32>
    %c0_18 = arith.constant 0 : index
    %c64_19 = arith.constant 64 : index
    %19 = vector.load %arg4[%c0_18, %c64_19] : memref<4x256xf32, #tpu.memory_space<vmem>>, vector<4x16xf32>
    tpu.vector_store %arg4[%c0_18, %c64_19], %18 {strides = array<i32>} : memref<4x256xf32, #tpu.memory_space<vmem>>, vector<4x16xf32>,
    %c0_20 = arith.constant 0 : index
    %c160 = arith.constant 160 : index
    %20 = vector.load %arg1[%c0_20, %c160] : memref<4x512xf32, #tpu.memory_space<vmem>>, vector<4x16xf32>
    %c0_21 = arith.constant 0 : index
    %c176 = arith.constant 176 : index
    %21 = vector.load %arg1[%c0_21, %c176] : memref<4x512xf32, #tpu.memory_space<vmem>>, vector<4x16xf32>
    %22 = arith.addf %20, %21 : vector<4x16xf32>
    %c0_22 = arith.constant 0 : index
    %c80_23 = arith.constant 80 : index
    %23 = vector.load %arg4[%c0_22, %c80_23] : memref<4x256xf32, #tpu.memory_space<vmem>>, vector<4x16xf32>
    tpu.vector_store %arg4[%c0_22, %c80_23], %22 {strides = array<i32>} : memref<4x256xf32, #tpu.memory_space<vmem>>, vector<4x16xf32>,
    %c0_24 = arith.constant 0 : index
    %c192 = arith.constant 192 : index
    %24 = vector.load %arg1[%c0_24, %c192] : memref<4x512xf32, #tpu.memory_space<vmem>>, vector<4x16xf32>
    %c0_25 = arith.constant 0 : index
    %c208 = arith.constant 208 : index
    %25 = vector.load %arg1[%c0_25, %c208] : memref<4x512xf32, #tpu.memory_space<vmem>>, vector<4x16xf32>
    %26 = arith.addf %24, %25 : vector<4x16xf32>
    %c0_26 = arith.constant 0 : index
    %c96_27 = arith.constant 96 : index
    %27 = vector.load %arg4[%c0_26, %c96_27] : memref<4x256xf32, #tpu.memory_space<vmem>>, vector<4x16xf32>
    tpu.vector_store %arg4[%c0_26, %c96_27], %26 {strides = array<i32>} : memref<4x256xf32, #tpu.memory_space<vmem>>, vector<4x16xf32>,
    %c0_28 = arith.constant 0 : index
    %c224 = arith.constant 224 : index
    %28 = vector.load %arg1[%c0_28, %c224] : memref<4x512xf32, #tpu.memory_space<vmem>>, vector<4x16xf32>
    %c0_29 = arith.constant 0 : index
    %c240 = arith.constant 240 : index
    %29 = vector.load %arg1[%c0_29, %c240] : memref<4x512xf32, #tpu.memory_space<vmem>>, vector<4x16xf32>
    %30 = arith.addf %28, %29 : vector<4x16xf32>
    %c0_30 = arith.constant 0 : index
    %c112_31 = arith.constant 112 : index
    %31 = vector.load %arg4[%c0_30, %c112_31] : memref<4x256xf32, #tpu.memory_space<vmem>>, vector<4x16xf32>
    tpu.vector_store %arg4[%c0_30, %c112_31], %30 {strides = array<i32>} : memref<4x256xf32, #tpu.memory_space<vmem>>, vector<4x16xf32>,
    %c0_32 = arith.constant 0 : index
    %c256 = arith.constant 256 : index
    %32 = vector.load %arg1[%c0_32, %c256] : memref<4x512xf32, #tpu.memory_space<vmem>>, vector<4x16xf32>
    %c0_33 = arith.constant 0 : index
    %c272 = arith.constant 272 : index
    %33 = vector.load %arg1[%c0_33, %c272] : memref<4x512xf32, #tpu.memory_space<vmem>>, vector<4x16xf32>
    %34 = arith.addf %32, %33 : vector<4x16xf32>
    %c0_34 = arith.constant 0 : index
    %c128_35 = arith.constant 128 : index
    %35 = vector.load %arg4[%c0_34, %c128_35] : memref<4x256xf32, #tpu.memory_space<vmem>>, vector<4x16xf32>
    tpu.vector_store %arg4[%c0_34, %c128_35], %34 {strides = array<i32>} : memref<4x256xf32, #tpu.memory_space<vmem>>, vector<4x16xf32>,
    %c0_36 = arith.constant 0 : index
    %c288 = arith.constant 288 : index
    %36 = vector.load %arg1[%c0_36, %c288] : memref<4x512xf32, #tpu.memory_space<vmem>>, vector<4x16xf32>
    %c0_37 = arith.constant 0 : index
    %c304 = arith.constant 304 : index
    %37 = vector.load %arg1[%c0_37, %c304] : memref<4x512xf32, #tpu.memory_space<vmem>>, vector<4x16xf32>
    %38 = arith.addf %36, %37 : vector<4x16xf32>
    %c0_38 = arith.constant 0 : index
    %c144_39 = arith.constant 144 : index
    %39 = vector.load %arg4[%c0_38, %c144_39] : memref<4x256xf32, #tpu.memory_space<vmem>>, vector<4x16xf32>
    tpu.vector_store %arg4[%c0_38, %c144_39], %38 {strides = array<i32>} : memref<4x256xf32, #tpu.memory_space<vmem>>, vector<4x16xf32>,
    %c0_40 = arith.constant 0 : index
    %c320 = arith.constant 320 : index
    %40 = vector.load %arg1[%c0_40, %c320] : memref<4x512xf32, #tpu.memory_space<vmem>>, vector<4x16xf32>
    %c0_41 = arith.constant 0 : index
    %c336 = arith.constant 336 : index
    %41 = vector.load %arg1[%c0_41, %c336] : memref<4x512xf32, #tpu.memory_space<vmem>>, vector<4x16xf32>
    %42 = arith.addf %40, %41 : vector<4x16xf32>
    %c0_42 = arith.constant 0 : index
    %c160_43 = arith.constant 160 : index
    %43 = vector.load %arg4[%c0_42, %c160_43] : memref<4x256xf32, #tpu.memory_space<vmem>>, vector<4x16xf32>
    tpu.vector_store %arg4[%c0_42, %c160_43], %42 {strides = array<i32>} : memref<4x256xf32, #tpu.memory_space<vmem>>, vector<4x16xf32>,
    %c0_44 = arith.constant 0 : index
    %c352 = arith.constant 352 : index
    %44 = vector.load %arg1[%c0_44, %c352] : memref<4x512xf32, #tpu.memory_space<vmem>>, vector<4x16xf32>
    %c0_45 = arith.constant 0 : index
    %c368 = arith.constant 368 : index
    %45 = vector.load %arg1[%c0_45, %c368] : memref<4x512xf32, #tpu.memory_space<vmem>>, vector<4x16xf32>
    %46 = arith.addf %44, %45 : vector<4x16xf32>
    %c0_46 = arith.constant 0 : index
    %c176_47 = arith.constant 176 : index
    %47 = vector.load %arg4[%c0_46, %c176_47] : memref<4x256xf32, #tpu.memory_space<vmem>>, vector<4x16xf32>
    tpu.vector_store %arg4[%c0_46, %c176_47], %46 {strides = array<i32>} : memref<4x256xf32, #tpu.memory_space<vmem>>, vector<4x16xf32>,
    %c0_48 = arith.constant 0 : index
    %c384 = arith.constant 384 : index
    %48 = vector.load %arg1[%c0_48, %c384] : memref<4x512xf32, #tpu.memory_space<vmem>>, vector<4x16xf32>
    %c0_49 = arith.constant 0 : index
    %c400 = arith.constant 400 : index
    %49 = vector.load %arg1[%c0_49, %c400] : memref<4x512xf32, #tpu.memory_space<vmem>>, vector<4x16xf32>
    %50 = arith.addf %48, %49 : vector<4x16xf32>
    %c0_50 = arith.constant 0 : index
    %c192_51 = arith.constant 192 : index
    %51 = vector.load %arg4[%c0_50, %c192_51] : memref<4x256xf32, #tpu.memory_space<vmem>>, vector<4x16xf32>
    tpu.vector_store %arg4[%c0_50, %c192_51], %50 {strides = array<i32>} : memref<4x256xf32, #tpu.memory_space<vmem>>, vector<4x16xf32>,
    %c0_52 = arith.constant 0 : index
    %c416 = arith.constant 416 : index
    %52 = vector.load %arg1[%c0_52, %c416] : memref<4x512xf32, #tpu.memory_space<vmem>>, vector<4x16xf32>
    %c0_53 = arith.constant 0 : index
    %c432 = arith.constant 432 : index
    %53 = vector.load %arg1[%c0_53, %c432] : memref<4x512xf32, #tpu.memory_space<vmem>>, vector<4x16xf32>
    %54 = arith.addf %52, %53 : vector<4x16xf32>
    %c0_54 = arith.constant 0 : index
    %c208_55 = arith.constant 208 : index
    %55 = vector.load %arg4[%c0_54, %c208_55] : memref<4x256xf32, #tpu.memory_space<vmem>>, vector<4x16xf32>
    tpu.vector_store %arg4[%c0_54, %c208_55], %54 {strides = array<i32>} : memref<4x256xf32, #tpu.memory_space<vmem>>, vector<4x16xf32>,
    %c0_56 = arith.constant 0 : index
    %c448 = arith.constant 448 : index
    %56 = vector.load %arg1[%c0_56, %c448] : memref<4x512xf32, #tpu.memory_space<vmem>>, vector<4x16xf32>
    %c0_57 = arith.constant 0 : index
    %c464 = arith.constant 464 : index
    %57 = vector.load %arg1[%c0_57, %c464] : memref<4x512xf32, #tpu.memory_space<vmem>>, vector<4x16xf32>
    %58 = arith.addf %56, %57 : vector<4x16xf32>
    %c0_58 = arith.constant 0 : index
    %c224_59 = arith.constant 224 : index
    %59 = vector.load %arg4[%c0_58, %c224_59] : memref<4x256xf32, #tpu.memory_space<vmem>>, vector<4x16xf32>
    tpu.vector_store %arg4[%c0_58, %c224_59], %58 {strides = array<i32>} : memref<4x256xf32, #tpu.memory_space<vmem>>, vector<4x16xf32>,
    %c0_60 = arith.constant 0 : index
    %c480 = arith.constant 480 : index
    %60 = vector.load %arg1[%c0_60, %c480] : memref<4x512xf32, #tpu.memory_space<vmem>>, vector<4x16xf32>
    %c0_61 = arith.constant 0 : index
    %c496 = arith.constant 496 : index
    %61 = vector.load %arg1[%c0_61, %c496] : memref<4x512xf32, #tpu.memory_space<vmem>>, vector<4x16xf32>
    %62 = arith.addf %60, %61 : vector<4x16xf32>
    %c0_62 = arith.constant 0 : index
    %c240_63 = arith.constant 240 : index
    %63 = vector.load %arg4[%c0_62, %c240_63] : memref<4x256xf32, #tpu.memory_space<vmem>>, vector<4x16xf32>
    tpu.vector_store %arg4[%c0_62, %c240_63], %62 {strides = array<i32>} : memref<4x256xf32, #tpu.memory_space<vmem>>, vector<4x16xf32>,
    %c0_64 = arith.constant 0 : index
    %c0_65 = arith.constant 0 : index
    %64 = vector.load %arg2[%c0_64, %c0_65] : memref<256x128xf32, #tpu.memory_space<vmem>>, vector<256x128xf32>
    %c0_66 = arith.constant 0 : index
    %c0_67 = arith.constant 0 : index
    %65 = vector.load %arg4[%c0_66, %c0_67] : memref<4x256xf32, #tpu.memory_space<vmem>>, vector<4x256xf32>
    %cst = arith.constant dense<0.000000e+00> : vector<4x128xf32>
    %66 = tpu.matmul %65, %64, %cst {dimension_numbers = #tpu.dot_dimension_numbers<[1], [0], [0], [1], [0, 0, 1, 1], [], []>} : vector<4x256xf32>, vector<256x128xf32>, vector<4x128xf32> -> vector<4x128xf32>
    %cst_68 = arith.constant 2.500000e-01 : f32
    %67 = vector.broadcast %cst_68 : f32 to vector<4x128xf32>
    %68 = arith.mulf %66, %67 : vector<4x128xf32>
    %c0_69 = arith.constant 0 : index
    %c0_70 = arith.constant 0 : index
    %69 = vector.load %arg3[%c0_69, %c0_70] : memref<4x128xf32, #tpu.memory_space<vmem>>, vector<4x128xf32>
    tpu.vector_store %arg3[%c0_69, %c0_70], %68 {strides = array<i32>} : memref<4x128xf32, #tpu.memory_space<vmem>>, vector<4x128xf32>,
    return
  }
  func.func @transform_0(%arg0: i32) -> (i32, i32) {
    %c0_i32 = arith.constant 0 : i32
    %c0_i32_0 = arith.constant 0 : i32
    return %arg0, %c0_i32 : i32, i32
  }
  func.func @transform_1(%arg0: i32) -> (i32, i32) {
    %c0_i32 = arith.constant 0 : i32
    %c0_i32_0 = arith.constant 0 : i32
    %c0_i32_1 = arith.constant 0 : i32
    return %c0_i32, %c0_i32_0 : i32, i32
  }
  func.func @transform_2(%arg0: i32) -> (i32, i32) {
    %c0_i32 = arith.constant 0 : i32
    %c0_i32_0 = arith.constant 0 : i32
    return %arg0, %c0_i32 : i32, i32
  }
}

</mosaic_0001>

<llo_original>
// kernel: tpu_custom_call.1
$region0: #{tpu_custom_call.1}
  #allocation0 [shape = 'u32[]', space=smem, size = 0x4, offset = 0x4, fixed_abs, tag = 'smem constant byte address 0x4 - core index']
  #allocation1 [shape = 'u32[72,128]{1,0:T(1,128)}', space=vmem, size = 0x9000, scoped, tag = 'internal scratch']
  #allocation2 [shape = 'f32[4,256]{1,0:T(4,128)}', space=vmem, size = 0x1000, scoped, tag = 'scratch operand']
  %s0 = inlined_call_operand.hbm [shape: f32[4,512], index: 0, kind: input, shape index: {}]
  %s1 = inlined_call_operand.hbm [shape: f32[256,128], index: 1, kind: input, shape index: {}]
  %s2 = inlined_call_operand.hbm [shape: f32[4,128], index: 2, kind: output, shape index: {}]
  %s3 = sld [smem:[#allocation0]]
  $region26: #{tpu_custom_call.1} parent=0
    _
  %s5 = ssub.s32 1, %s3
  %s6 = scalar_select 0, %s5, %s3
  $region1: #{tpu_custom_call.1} parent=0
    #allocation3 [shape = 'u8[8192]{0}', space=vmem, size = 0x2000, scoped, tag = 'input window, operand 0, single buffered']
    #allocation4 [shape = 's32[1]{0}', space=sflag, size = 0x4, scoped, tag = 'scoped memory for tpu_custom_call.1']
    #allocation5 [shape = 's32[1]{0}', space=sflag, size = 0x4, scoped, tag = 'scoped memory for tpu_custom_call.1']
    #allocation6 [shape = 'u8[131072]{0}', space=vmem, size = 0x20000, scoped, tag = 'input window, operand 1, single buffered']
    #allocation7 [shape = 's32[1]{0}', space=sflag, size = 0x4, scoped, tag = 'scoped memory for tpu_custom_call.1']
    #allocation8 [shape = 'u8[2048]{0}', space=vmem, size = 0x800, scoped, tag = 'output window, operand 0, single buffered']
    %7 = vsyncpa [#allocation4], 0
    %8 = vsyncpa [#allocation7], 0
    %9 = vsyncpa [#allocation5], 0
    // Predicated region
    $region2: #{tpu_custom_call.1} parent=1 // pred_check
      _
    $region3: #{tpu_custom_call.1} parent=1 // pred_check_branch
      %11 = sbr.rel (0) target = $region5
    $region4: #{tpu_custom_call.1} parent=1 // pred_region
      %13 = vsyncadd [#allocation4], 0
      %s15 = sshll.u32 %s0, 4
      %s16 = int_to_ptr.hbm [resolvable:$true] %s15
      %s17 = sshll.u32 [#allocation3], 4
      %s18 = int_to_ptr.vmem [resolvable:$true] %s17
      %20 = dma.hbm_to_vmem [thread:$0]  %s16, 256, %s18, [#allocation4]
    $region5: #{tpu_custom_call.1} parent=1 // pred_fallthru
      _
    // Predicated region
    $region6: #{tpu_custom_call.1} parent=1 // pred_check
      _
    $region7: #{tpu_custom_call.1} parent=1 // pred_check_branch
      %22 = sbr.rel (0) target = $region9
    $region8: #{tpu_custom_call.1} parent=1 // pred_region
      %24 = vsyncadd [#allocation7], 0
      %s25 = sshll.u32 %s1, 4
      %s26 = int_to_ptr.hbm [resolvable:$true] %s25
      %s27 = sshll.u32 [#allocation6], 4
      %s28 = int_to_ptr.vmem [resolvable:$true] %s27
      %33 = dma.hbm_to_vmem [thread:$0]  %s26, 4096, %s28, [#allocation7], 128, 128, 8
    $region9: #{tpu_custom_call.1} parent=1 // pred_fallthru
      _
    // Predicated region
    $region10: #{tpu_custom_call.1} parent=1 // pred_check
      _
    $region11: #{tpu_custom_call.1} parent=1 // pred_check_branch
      %35 = sbr.rel (0) target = $region13
    $region12: #{tpu_custom_call.1} parent=1 // pred_region
      %37 = dma.done [#allocation4], 256
    $region13: #{tpu_custom_call.1} parent=1 // pred_fallthru
      _
    // Predicated region
    $region14: #{tpu_custom_call.1} parent=1 // pred_check
      _
    $region15: #{tpu_custom_call.1} parent=1 // pred_check_branch
      %39 = sbr.rel (0) target = $region17
    $region16: #{tpu_custom_call.1} parent=1 // pred_region
      %41 = dma.done [#allocation7], 4096
    $region17: #{tpu_custom_call.1} parent=1 // pred_fallthru
      _
    %v42 = vld [vmem:[#allocation3] sm:$0xf]
    %44 = vrot.lane.b32.xlu0 %v42, 112
    %v45 = vpop.permute.xlu0 %44
    %v47 = vadd.f32 %v42, %v45
    %vm48 = vcmask 125952
    %49 = vst.msk [vmem:[#allocation2] sm:$0xf] %vm48, %v47
    %v50 = vld [vmem:[#allocation3] sm:$0xf]
    %52 = vrot.lane.b32.xlu0 %v50, 112
    %v53 = vpop.permute.xlu0 %52
    %v55 = vadd.f32 %v50, %v53
    %57 = vrot.lane.b32.xlu0 %v55, 112
    %v58 = vpop.permute.xlu0 %57
    %vm60 = vcmask 257152
    %61 = vst.msk [vmem:[#allocation2] sm:$0xf] %vm60, %v58
    %v62 = vld [vmem:[#allocation3] sm:$0xf]
    %64 = vrot.lane.b32.xlu0 %v62, 112
    %v65 = vpop.permute.xlu0 %64
    %v67 = vadd.f32 %v62, %v65
    %69 = vrot.lane.b32.xlu0 %v67, 96
    %v70 = vpop.permute.xlu0 %69
    %vm72 = vcmask 388352
    %73 = vst.msk [vmem:[#allocation2] sm:$0xf] %vm72, %v70
    %v74 = vld [vmem:[#allocation3] sm:$0xf]
    %76 = vrot.lane.b32.xlu0 %v74, 112
    %v77 = vpop.permute.xlu0 %76
    %v79 = vadd.f32 %v74, %v77
    %81 = vrot.lane.b32.xlu0 %v79, 80
    %v82 = vpop.permute.xlu0 %81
    %vm84 = vcmask 519552
    %85 = vst.msk [vmem:[#allocation2] sm:$0xf] %vm84, %v82
    %v86 = vld [vmem:[#allocation3 + $0x4] sm:$0xf]
    %88 = vrot.lane.b32.xlu0 %v86, 112
    %v89 = vpop.permute.xlu0 %88
    %v91 = vadd.f32 %v86, %v89
    %93 = vrot.lane.b32.xlu0 %v91, 64
    %v94 = vpop.permute.xlu0 %93
    %vm96 = vcmask 650752
    %97 = vst.msk [vmem:[#allocation2] sm:$0xf] %vm96, %v94
    %v98 = vld [vmem:[#allocation3 + $0x4] sm:$0xf]
    %100 = vrot.lane.b32.xlu0 %v98, 112
    %v101 = vpop.permute.xlu0 %100
    %v103 = vadd.f32 %v98, %v101
    %105 = vrot.lane.b32.xlu0 %v103, 48
    %v106 = vpop.permute.xlu0 %105
    %vm108 = vcmask 781952
    %109 = vst.msk [vmem:[#allocation2] sm:$0xf] %vm108, %v106
    %v110 = vld [vmem:[#allocation3 + $0x4] sm:$0xf]
    %112 = vrot.lane.b32.xlu0 %v110, 112
    %v113 = vpop.permute.xlu0 %112
    %v115 = vadd.f32 %v110, %v113
    %117 = vrot.lane.b32.xlu0 %v115, 32
    %v118 = vpop.permute.xlu0 %117
    %vm120 = vcmask 913152
    %121 = vst.msk [vmem:[#allocation2] sm:$0xf] %vm120, %v118
    %v122 = vld [vmem:[#allocation3 + $0x4] sm:$0xf]
    %124 = vrot.lane.b32.xlu0 %v122, 112
    %v125 = vpop.permute.xlu0 %124
    %v127 = vadd.f32 %v122, %v125
    %129 = vrot.lane.b32.xlu0 %v127, 16
    %v130 = vpop.permute.xlu0 %129
    %vm132 = vcmask 1044352
    %133 = vst.msk [vmem:[#allocation2] sm:$0xf] %vm132, %v130
    %v134 = vld [vmem:[#allocation3 + $0x8] sm:$0xf]
    %136 = vrot.lane.b32.xlu0 %v134, 112
    %v137 = vpop.permute.xlu0 %136
    %v139 = vadd.f32 %v134, %v137
    %140 = vst.msk [vmem:[#allocation2 + $0x4] sm:$0xf] %vm48, %v139
    %v141 = vld [vmem:[#allocation3 + $0x8] sm:$0xf]
    %143 = vrot.lane.b32.xlu0 %v141, 112
    %v144 = vpop.permute.xlu0 %143
    %v146 = vadd.f32 %v141, %v144
    %148 = vrot.lane.b32.xlu0 %v146, 112
    %v149 = vpop.permute.xlu0 %148
    %151 = vst.msk [vmem:[#allocation2 + $0x4] sm:$0xf] %vm60, %v149
    %v152 = vld [vmem:[#allocation3 + $0x8] sm:$0xf]
    %154 = vrot.lane.b32.xlu0 %v152, 112
    %v155 = vpop.permute.xlu0 %154
    %v157 = vadd.f32 %v152, %v155
    %159 = vrot.lane.b32.xlu0 %v157, 96
    %v160 = vpop.permute.xlu0 %159
    %162 = vst.msk [vmem:[#allocation2 + $0x4] sm:$0xf] %vm72, %v160
    %v163 = vld [vmem:[#allocation3 + $0x8] sm:$0xf]
    %165 = vrot.lane.b32.xlu0 %v163, 112
    %v166 = vpop.permute.xlu0 %165
    %v168 = vadd.f32 %v163, %v166
    %170 = vrot.lane.b32.xlu0 %v168, 80
    %v171 = vpop.permute.xlu0 %170
    %173 = vst.msk [vmem:[#allocation2 + $0x4] sm:$0xf] %vm84, %v171
    %v174 = vld [vmem:[#allocation3 + $0xc] sm:$0xf]
    %176 = vrot.lane.b32.xlu0 %v174, 112
    %v177 = vpop.permute.xlu0 %176
    %v179 = vadd.f32 %v174, %v177
    %181 = vrot.lane.b32.xlu0 %v179, 64
    %v182 = vpop.permute.xlu0 %181
    %184 = vst.msk [vmem:[#allocation2 + $0x4] sm:$0xf] %vm96, %v182
    %v185 = vld [vmem:[#allocation3 + $0xc] sm:$0xf]
    %187 = vrot.lane.b32.xlu0 %v185, 112
    %v188 = vpop.permute.xlu0 %187
    %v190 = vadd.f32 %v185, %v188
    %192 = vrot.lane.b32.xlu0 %v190, 48
    %v193 = vpop.permute.xlu0 %192
    %195 = vst.msk [vmem:[#allocation2 + $0x4] sm:$0xf] %vm108, %v193
    %v196 = vld [vmem:[#allocation3 + $0xc] sm:$0xf]
    %198 = vrot.lane.b32.xlu0 %v196, 112
    %v199 = vpop.permute.xlu0 %198
    %v201 = vadd.f32 %v196, %v199
    %203 = vrot.lane.b32.xlu0 %v201, 32
    %v204 = vpop.permute.xlu0 %203
    %206 = vst.msk [vmem:[#allocation2 + $0x4] sm:$0xf] %vm120, %v204
    %v207 = vld [vmem:[#allocation3 + $0xc] sm:$0xf]
    %209 = vrot.lane.b32.xlu0 %v207, 112
    %v210 = vpop.permute.xlu0 %209
    %v212 = vadd.f32 %v207, %v210
    %214 = vrot.lane.b32.xlu0 %v212, 16
    %v215 = vpop.permute.xlu0 %214
    %217 = vst.msk [vmem:[#allocation2 + $0x4] sm:$0xf] %vm132, %v215
    %v218 = vld [vmem:[#allocation6] sm:$0xff]
    %v219 = vld [vmem:[#allocation6 + $0x8] sm:$0xff]
    %v220 = vld [vmem:[#allocation6 + $0x10] sm:$0xff]
    %v221 = vld [vmem:[#allocation6 + $0x18] sm:$0xff]
    %v222 = vld [vmem:[#allocation6 + $0x20] sm:$0xff]
    %v223 = vld [vmem:[#allocation6 + $0x28] sm:$0xff]
    %v224 = vld [vmem:[#allocation6 + $0x30] sm:$0xff]
    %v225 = vld [vmem:[#allocation6 + $0x38] sm:$0xff]
    %v226 = vld [vmem:[#allocation6 + $0x40] sm:$0xff]
    %v227 = vld [vmem:[#allocation6 + $0x48] sm:$0xff]
    %v228 = vld [vmem:[#allocation6 + $0x50] sm:$0xff]
    %v229 = vld [vmem:[#allocation6 + $0x58] sm:$0xff]
    %v230 = vld [vmem:[#allocation6 + $0x60] sm:$0xff]
    %v231 = vld [vmem:[#allocation6 + $0x68] sm:$0xff]
    %v232 = vld [vmem:[#allocation6 + $0x70] sm:$0xff]
    %v233 = vld [vmem:[#allocation6 + $0x78] sm:$0xff]
    %v234 = vld [vmem:[#allocation6 + $0x80] sm:$0xff]
    %v235 = vld [vmem:[#allocation6 + $0x88] sm:$0xff]
    %v236 = vld [vmem:[#allocation6 + $0x90] sm:$0xff]
    %v237 = vld [vmem:[#allocation6 + $0x98] sm:$0xff]
    %v238 = vld [vmem:[#allocation6 + $0xa0] sm:$0xff]
    %v239 = vld [vmem:[#allocation6 + $0xa8] sm:$0xff]
    %v240 = vld [vmem:[#allocation6 + $0xb0] sm:$0xff]
    %v241 = vld [vmem:[#allocation6 + $0xb8] sm:$0xff]
    %v242 = vld [vmem:[#allocation6 + $0xc0] sm:$0xff]
    %v243 = vld [vmem:[#allocation6 + $0xc8] sm:$0xff]
    %v244 = vld [vmem:[#allocation6 + $0xd0] sm:$0xff]
    %v245 = vld [vmem:[#allocation6 + $0xd8] sm:$0xff]
    %v246 = vld [vmem:[#allocation6 + $0xe0] sm:$0xff]
    %v247 = vld [vmem:[#allocation6 + $0xe8] sm:$0xff]
    %v248 = vld [vmem:[#allocation6 + $0xf0] sm:$0xff]
    %v249 = vld [vmem:[#allocation6 + $0xf8] sm:$0xff]
    %v250 = vld [vmem:[#allocation2] sm:$0xff]
    %252 = vst [vmem:[#allocation1] ss:$2 sm:$0xff] %v250
    %v253 = vld.sshfl [vmem:[#allocation1] sm:$0xff pattern:$0x75316420]
    %v254 = vld.sshfl [vmem:[#allocation1 + $0x8] sm:$0xff pattern:$0x75316420]
    %257 = vmatpush.msra.mxu0 %v233
    %258 = vmatpush.msra.mxu0 %v232
    %259 = vmatpush.msra.mxu0 %v231
    %260 = vmatpush.msra.mxu0 %v230
    %261 = vmatpush.msra.mxu0 %v229
    %262 = vmatpush.msra.mxu0 %v228
    %263 = vmatpush.msra.mxu0 %v227
    %264 = vmatpush.msra.mxu0 %v226
    %265 = vmatpush.msra.mxu0 %v225
    %266 = vmatpush.msra.mxu0 %v224
    %267 = vmatpush.msra.mxu0 %v223
    %268 = vmatpush.msra.mxu0 %v222
    %269 = vmatpush.msra.mxu0 %v221
    %270 = vmatpush.msra.mxu0 %v220
    %271 = vmatpush.msra.mxu0 %v219
    %272 = vmatpush.msra.mxu0 %v218
    %273 = vmatmul.f32.gmra.mxu0 %v253
    %v274 = vpop.f32.mrf.mxu0
    %v275 = vadd.f32 0.0, %v274
    %276 = vdwg.mxu0
    %277 = vmatpush.msra.mxu0 %v249
    %278 = vmatpush.msra.mxu0 %v248
    %279 = vmatpush.msra.mxu0 %v247
    %280 = vmatpush.msra.mxu0 %v246
    %281 = vmatpush.msra.mxu0 %v245
    %282 = vmatpush.msra.mxu0 %v244
    %283 = vmatpush.msra.mxu0 %v243
    %284 = vmatpush.msra.mxu0 %v242
    %285 = vmatpush.msra.mxu0 %v241
    %286 = vmatpush.msra.mxu0 %v240
    %287 = vmatpush.msra.mxu0 %v239
    %288 = vmatpush.msra.mxu0 %v238
    %289 = vmatpush.msra.mxu0 %v237
    %290 = vmatpush.msra.mxu0 %v236
    %291 = vmatpush.msra.mxu0 %v235
    %292 = vmatpush.msra.mxu0 %v234
    %293 = vmatmul.f32.gmra.mxu0 %v254
    %v294 = vpop.f32.mrf.mxu0
    %v295 = vadd.f32 %v275, %v294
    %296 = vdwg.mxu0
    %v297 = vmul.f32 %v295, 0.25
    %298 = vst [vmem:[#allocation8] sm:$0xf] %v297
    // Predicated region
    $region18: #{tpu_custom_call.1} parent=1 // pred_check
      _
    $region19: #{tpu_custom_call.1} parent=1 // pred_check_branch
      %300 = sbr.rel (0) target = $region21
    $region20: #{tpu_custom_call.1} parent=1 // pred_region
      %302 = vsyncadd [#allocation5], 0
      %s304 = sshll.u32 [#allocation8], 4
      %s305 = int_to_ptr.vmem [resolvable:$true] %s304
      %s306 = sshll.u32 %s2, 4
      %s307 = int_to_ptr.hbm [resolvable:$true] %s306
      %309 = dma.vmem_to_hbm [thread:$0]  %s305, 64, %s307, [#allocation5]
    $region21: #{tpu_custom_call.1} parent=1 // pred_fallthru
      _
    // Predicated region
    $region22: #{tpu_custom_call.1} parent=1 // pred_check
      _
    $region23: #{tpu_custom_call.1} parent=1 // pred_check_branch
      %311 = sbr.rel (0) target = $region25
    $region24: #{tpu_custom_call.1} parent=1 // pred_region
      %313 = dma.done [#allocation5], 64
    $region25: #{tpu_custom_call.1} parent=1 // pred_fallthru
      _
    %314 = vsyncpa [#allocation4], 1
    %315 = vsyncpa [#allocation7], 1
    %316 = vsyncpa [#allocation5], 1

</llo_original>
